<compile_context>
chip_gen: v5e
topology: v5e:2x2
jax: 0.10.0
libtpu: 0.0.40
codegen_flags: <defaults>
</compile_context>

<pallas_src>
import functools

import numpy as np
import jax
import jax.numpy as jnp
from jax import lax
from jax.experimental import pallas as pl
from jax.experimental.pallas import tpu as pltpu


_BT = 8                                  # batches per grid step (sublane axis)
_LANES = 128                             # lane width; Q / keep are padded to this
_I32_MIN = int(np.iinfo(np.int32).min)   # "dead" packed key


def _round_up(x, m):
    return ((x + m - 1) // m) * m


def _nms_kernel(keys_ref, x1_ref, x2_ref, keep_ref, *,
                max_iter, overlap, unroll, idx_mask):
    # keys_ref: (BT, Qp) int32 packed keys (score bits | lane rank), dead = INT32_MIN
    # x1_ref/x2_ref: (BT, Qp) f32 class-offset segment endpoints
    # keep_ref: (BT, Kp) int32 kept query indices (-1 padded)
    BT, Qp = keys_ref.shape
    _, Kp = keep_ref.shape
    dead = jnp.int32(_I32_MIN)
    n_outer = -(-max_iter // unroll)     # ceil(max_iter / unroll), static

    def one_step(tt, ms, keep):
        # Loop invariants stay in VMEM (vld slots are idle in this kernel);
        # only the packed-key state `ms` and the narrow `keep` are carried.
        x1 = x1_ref[...]                                            # (BT,Qp) f32
        x2 = x2_ref[...]                                            # (BT,Qp) f32

        # Single lane reduction gives both the best score and (via the packed
        # low bits) a unique winning lane for every still-live batch row.
        best = jnp.max(ms, axis=-1, keepdims=True)                  # (BT,1) i32
        row_active = best > dead                                    # (BT,1)
        onehot = ms == best                                         # (BT,Qp)
        i = (Qp - 1) - jnp.bitwise_and(best, idx_mask)              # (BT,1) query idx

        # Coordinates of the selection: two independent masked lane reductions
        # (they overlap on the XLU; the class extract was removed entirely).
        x1_i = jnp.max(jnp.where(onehot, x1, -jnp.inf), axis=-1, keepdims=True)
        x2_i = jnp.min(jnp.where(onehot, x2, jnp.inf), axis=-1, keepdims=True)

        # Row activity is monotone, so count == tt for active rows: the kept
        # index lands at column tt (guarded writes; no count carry needed).
        k_iota = lax.broadcasted_iota(jnp.int32, (BT, Kp), 1)
        keep = jnp.where(jnp.logical_and(row_active, k_iota == tt), i, keep)

        # Suppress remaining queries whose (class-offset) 1-D overlap exceeds
        # the threshold, plus the selected query itself.
        inter = jnp.maximum(jnp.minimum(x2, x2_i) - jnp.maximum(x1, x1_i), 0.0)
        ms = jnp.where(jnp.logical_or(inter > overlap, onehot), dead, ms)
        return ms, keep, best

    def cond(carry):
        t, go, _, _ = carry
        return jnp.logical_and(go > 0, t < n_outer)

    def body(carry):
        t, _, ms, keep = carry
        base = t * unroll
        best = None
        for kk in range(unroll):         # amortize the scalar early-exit check
            ms, keep, best = one_step(base + kk, ms, keep)
        # Early-exit flag from the tiny (BT,1) pre-suppression row maxima of
        # the last unrolled step (no extra full-width reduction).
        go = (jnp.max(best) > dead).astype(jnp.int32)
        return t + 1, go, ms, keep

    keep0 = jnp.full((BT, Kp), -1, dtype=jnp.int32)
    carry0 = (jnp.int32(0), jnp.int32(1), keys_ref[...], keep0)
    _, _, _, keep = lax.while_loop(cond, body, carry0)
    keep_ref[...] = keep


@functools.partial(jax.jit, static_argnums=(2, 3))
def _nms_pallas(pred_logits, pred_segments, overlap, top_k):
    B, Q, C = pred_logits.shape
    logits = pred_logits.astype(jnp.float32)

    # max softmax prob == 1 / sum(exp(l - max)) exactly (exp(0) == 1); the full
    # softmax is never materialised; argmax of raw logits == argmax of softmax.
    m = jnp.max(logits, axis=-1, keepdims=True)
    scores = 1.0 / jnp.sum(jnp.exp(logits - m), axis=-1)            # (B,Q) in (1/C, 1]
    classes = jnp.argmax(logits, axis=-1).astype(jnp.int32)         # (B,Q)
    x1 = pred_segments[..., 0].astype(jnp.float32)                  # (B,Q)
    x2 = pred_segments[..., 1].astype(jnp.float32)                  # (B,Q)

    # Batched-NMS class offset: segments of different classes can never overlap
    # after shifting by class_id * span, so the kernel needs no class array.
    # NOTE: f32 rounding of (x + class*span) can perturb `inter` by ~ulp(C*span)
    # near the threshold for very large class ids / coordinate ranges.
    span = (jnp.max(x2) - jnp.min(x1)) + 1.0
    off = classes.astype(jnp.float32) * span
    x1o = x1 + off
    x2o = x2 + off

    # Pack the lane index into the low mantissa bits of the positive score so
    # a single lane max-reduce yields both the best score and its (unique) lane.
    Qp = _round_up(Q, _LANES)
    idx_bits = max(1, (Qp - 1).bit_length())
    idx_mask = (1 << idx_bits) - 1
    sbits = lax.bitcast_convert_type(scores, jnp.int32)   # positive f32 -> order-preserving
    rank = (Qp - 1) - jnp.arange(Q, dtype=jnp.int32)      # score ties -> min index wins
    keys = jnp.bitwise_or(jnp.bitwise_and(sbits, jnp.int32(~idx_mask)), rank[None, :])

    # top_k pre-selection via a threshold compare on the packed keys (unique per
    # lane, so exactly top_k survive) instead of an XLA scatter.
    if top_k < Q:
        vals = lax.top_k(keys, top_k)[0]
        keys = jnp.where(keys >= vals[:, -1:], keys, jnp.int32(_I32_MIN))

    # Pad to lane/sublane-dense tiles; padded queries / batch rows get dead keys.
    Bp = _round_up(B, _BT)
    keys_p = jnp.pad(keys, ((0, Bp - B), (0, Qp - Q)), constant_values=_I32_MIN)
    x1_p = jnp.pad(x1o, ((0, Bp - B), (0, Qp - Q)))
    x2_p = jnp.pad(x2o, ((0, Bp - B), (0, Qp - Q)))

    max_iter = int(min(Q, top_k))
    Kp = _round_up(max_iter, _LANES)     # narrow, lane-dense keep output

    kernel = functools.partial(_nms_kernel, max_iter=max_iter,
                               overlap=float(overlap), unroll=4,
                               idx_mask=idx_mask)
    keep = pl.pallas_call(
        kernel,
        grid=(Bp // _BT,),
        in_specs=[pl.BlockSpec((_BT, Qp), lambda g: (g, 0))
                  for _ in range(3)],
        out_specs=pl.BlockSpec((_BT, Kp), lambda g: (g, 0)),
        out_shape=jax.ShapeDtypeStruct((Bp, Kp), jnp.int32),
        compiler_params=pltpu.CompilerParams(
            dimension_semantics=("parallel",)),
    )(keys_p, x1_p, x2_p)

    keep = keep[:B]                                           # (B, Kp)
    counts = jnp.sum(keep >= 0, axis=-1).astype(jnp.int32)    # (B,)
    return keep, counts


class NMSPallas:
    """Pallas-backed equivalent of the PyTorch NMS matcher (no thresholds)."""

    def __init__(self, overlap: float = 0.0, top_k: int = 200):
        self.overlap = overlap
        self.top_k = top_k
        self.keep_k = 200
        self.num_queries = 100

    def __call__(self, outputs):
        # TODO(synk): given_class / cur_thresh / class_wise_thres filtering
        # branches are not implemented (only the default None path is).
        pred_logits = outputs['pred_logits']        # [B, Q, C]
        pred_segments = outputs['pred_segments']    # [B, Q, 2]
        B = pred_logits.shape[0]

        keep_dev, count_dev = _nms_pallas(pred_logits, pred_segments,
                                          self.overlap, self.top_k)
        keep = np.asarray(keep_dev)                 # (B, Kp)
        count = np.asarray(count_dev)               # (B,)

        # host-side glue replicating: keep = keep[keep > -1].unsqueeze(0)[:keep_k]
        rows = [keep[b, :int(count[b])][None, :] for b in range(B)]
        # TODO(synk): torch.cat requires equal per-batch keep counts (the PyTorch
        # code errors otherwise); truncate to the min count so concatenation is
        # always well-defined.
        min_c = min(int(r.shape[1]) for r in rows) if rows else 0
        rows = [r[:, :min_c] for r in rows]
        keep_tensor = np.concatenate(rows, axis=0)                       # [B, min_c]
        out = np.concatenate([keep_tensor, np.zeros_like(keep_tensor)],
                             axis=0).astype(np.int32)                    # [2B, min_c]
        return [out]


def _reference_nms(pred_logits, pred_segments, overlap, top_k):
    """Pure-numpy replica of the PyTorch greedy NMS loop (for verification)."""
    B, Q, _ = pred_logits.shape
    keeps, counts = [], []
    for b in range(B):
        logits = pred_logits[b]
        e = np.exp(logits - logits.max(-1, keepdims=True))
        p = e / e.sum(-1, keepdims=True)
        scores = p.max(-1)
        classes = p.argmax(-1)
        x1 = pred_segments[b, :, 0]
        x2 = pred_segments[b, :, 1]
        order = np.argsort(scores)          # ascending, like torch.sort
        idx = list(order[-top_k:])
        keep = -np.ones(Q, dtype=np.int32)
        count = 0
        while len(idx) > 0:
            i = idx[-1]
            keep[count] = i
            count += 1
            if len(idx) == 1:
                break
            idx = idx[:-1]
            xx1 = np.maximum(x1[idx], x1[i])
            xx2 = np.minimum(x2[idx], x2[i])
            inter = np.maximum(xx2 - xx1, 0.0)
            sel = np.logical_or(inter <= overlap, classes[idx] != classes[i])
            idx = [j for j, s in zip(idx, sel) if s]
        keeps.append(keep)
        counts.append(count)
    return np.stack(keeps), np.array(counts, dtype=np.int32)


if __name__ == "__main__":
    key = jax.random.PRNGKey(0)
    B, Q, C = 2, 16, 8
    k1, k2, k3 = jax.random.split(key, 3)
    pred_logits = jax.random.normal(k1, (B, Q, C), dtype=jnp.float32)
    starts = jax.random.uniform(k2, (B, Q, 1), dtype=jnp.float32)
    lengths = jax.random.uniform(k3, (B, Q, 1), dtype=jnp.float32) * 0.3
    pred_segments = jnp.concatenate([starts, starts + lengths], axis=-1)  # [B, Q, 2]

    matcher = NMSPallas(overlap=0.0, top_k=200)

    keep_dev, count_dev = _nms_pallas(pred_logits, pred_segments,
                                      matcher.overlap, matcher.top_k)
    jax.block_until_ready((keep_dev, count_dev))

    keep_ref, count_ref = _reference_nms(np.asarray(pred_logits),
                                         np.asarray(pred_segments),
                                         matcher.overlap, matcher.top_k)
    keep_np = np.asarray(keep_dev)           # (B, Kp)
    count_np = np.asarray(count_dev)         # (B,)
    W = min(Q, keep_np.shape[1])
    assert np.array_equal(count_np, count_ref), (count_np, count_ref)
    assert np.array_equal(keep_np[:, :W], keep_ref[:, :W]), \
        (keep_np[:, :W], keep_ref[:, :W])

    result = matcher({'pred_logits': pred_logits, 'pred_segments': pred_segments})
    assert result[0].dtype == np.int32 and result[0].shape[0] == 2 * B

    print("KERNEL_OK")
</pallas_src>

<mosaic_0001>
module attributes {stable_mosaic.version = 11 : i64} {
  func.func @_nms_kernel(%arg0: i32, %arg1: memref<8x128xi32, #tpu.memory_space<vmem>>, %arg2: memref<8x128xf32, #tpu.memory_space<vmem>>, %arg3: memref<8x128xf32, #tpu.memory_space<vmem>>, %arg4: memref<8x128xi32, #tpu.memory_space<vmem>>) attributes {dimension_semantics = [#tpu.dimension_semantics<parallel>], iteration_bounds = array<i64: 1>, scalar_prefetch = 0 : i64, scratch_operands = 0 : i64, tpu.core_type = #tpu.core_type<tc>, window_params = [{transform_indices = @transform_0, window_bounds = array<i64: 8, 128>}, {transform_indices = @transform_1, window_bounds = array<i64: 8, 128>}, {transform_indices = @transform_2, window_bounds = array<i64: 8, 128>}, {transform_indices = @transform_3, window_bounds = array<i64: 8, 128>}]} {
    %c-1_i32 = arith.constant -1 : i32
    %0 = vector.broadcast %c-1_i32 : i32 to vector<8x128xi32>
    %c0 = arith.constant 0 : index
    %c0_0 = arith.constant 0 : index
    %1 = vector.load %arg1[%c0, %c0_0] : memref<8x128xi32, #tpu.memory_space<vmem>>, vector<8x128xi32>
    %c-2147483648_i32 = arith.constant -2147483648 : i32
    %c0_i32 = arith.constant 0 : i32
    %c1_i32 = arith.constant 1 : i32
    %2:4 = scf.while (%arg5 = %c0_i32, %arg6 = %c1_i32, %arg7 = %1, %arg8 = %0) : (i32, i32, vector<8x128xi32>, vector<8x128xi32>) -> (i32, i32, vector<8x128xi32>, vector<8x128xi32>) {
      %c0_i32_3 = arith.constant 0 : i32
      %4 = arith.cmpi sgt, %arg6, %c0_i32_3 : i32
      %c4_i32 = arith.constant 4 : i32
      %5 = arith.cmpi slt, %arg5, %c4_i32 : i32
      %6 = arith.andi %4, %5 : i1
      scf.condition(%6) %arg5, %arg6, %arg7, %arg8 : i32, i32, vector<8x128xi32>, vector<8x128xi32>
    } do {
    ^bb0(%arg5: i32, %arg6: i32, %arg7: vector<8x128xi32>, %arg8: vector<8x128xi32>):
      %c4_i32 = arith.constant 4 : i32
      %4 = arith.muli %arg5, %c4_i32 : i32
      %c0_i32_3 = arith.constant 0 : i32
      %5 = arith.addi %4, %c0_i32_3 : i32
      %c0_4 = arith.constant 0 : index
      %c0_5 = arith.constant 0 : index
      %6 = vector.load %arg2[%c0_4, %c0_5] : memref<8x128xf32, #tpu.memory_space<vmem>>, vector<8x128xf32>
      %c0_6 = arith.constant 0 : index
      %c0_7 = arith.constant 0 : index
      %7 = vector.load %arg3[%c0_6, %c0_7] : memref<8x128xf32, #tpu.memory_space<vmem>>, vector<8x128xf32>
      %cst = arith.constant dense<-2147483648> : vector<8xi32>
      %8 = vector.multi_reduction <maxsi>, %arg7, %cst [1] : vector<8x128xi32> to vector<8xi32>
      %9 = vector.shape_cast %8 : vector<8xi32> to vector<8x1xi32>
      %10 = vector.broadcast %c-2147483648_i32 : i32 to vector<8x1xi32>
      %11 = arith.cmpi sgt, %9, %10 : vector<8x1xi32>
      %12 = vector.broadcast %9 : vector<8x1xi32> to vector<8x128xi32>
      %13 = arith.cmpi eq, %arg7, %12 : vector<8x128xi32>
      %c127_i32 = arith.constant 127 : i32
      %14 = vector.broadcast %c127_i32 : i32 to vector<8x1xi32>
      %15 = arith.andi %9, %14 : vector<8x1xi32>
      %c127_i32_8 = arith.constant 127 : i32
      %16 = vector.broadcast %c127_i32_8 : i32 to vector<8x1xi32>
      %17 = arith.subi %16, %15 : vector<8x1xi32>
      %cst_9 = arith.constant 0xFF800000 : f32
      %18 = vector.broadcast %cst_9 : f32 to vector<8x128xf32>
      %19 = arith.select %13, %6, %18 : vector<8x128xi1>, vector<8x128xf32>
      %cst_10 = arith.constant dense<0xFF800000> : vector<8xf32>
      %20 = vector.multi_reduction <maximumf>, %19, %cst_10 [1] : vector<8x128xf32> to vector<8xf32>
      %21 = vector.shape_cast %20 : vector<8xf32> to vector<8x1xf32>
      %cst_11 = arith.constant 0x7F800000 : f32
      %22 = vector.broadcast %cst_11 : f32 to vector<8x128xf32>
      %23 = arith.select %13, %7, %22 : vector<8x128xi1>, vector<8x128xf32>
      %cst_12 = arith.constant dense<0x7F800000> : vector<8xf32>
      %24 = vector.multi_reduction <minimumf>, %23, %cst_12 [1] : vector<8x128xf32> to vector<8xf32>
      %25 = vector.shape_cast %24 : vector<8xf32> to vector<8x1xf32>
      %26 = tpu.iota {dimensions = array<i32: 1>} : vector<8x128xi32>
      %27 = vector.broadcast %5 : i32 to vector<8x128xi32>
      %28 = arith.cmpi eq, %26, %27 : vector<8x128xi32>
      %29 = vector.broadcast %11 : vector<8x1xi1> to vector<8x128xi1>
      %30 = arith.andi %29, %28 : vector<8x128xi1>
      %31 = vector.shape_cast %17 : vector<8x1xi32> to vector<8x1xi32>
      %32 = vector.broadcast %31 : vector<8x1xi32> to vector<8x128xi32>
      %33 = arith.select %30, %32, %arg8 : vector<8x128xi1>, vector<8x128xi32>
      %34 = vector.broadcast %25 : vector<8x1xf32> to vector<8x128xf32>
      %35 = arith.minimumf %7, %34 : vector<8x128xf32>
      %36 = vector.broadcast %21 : vector<8x1xf32> to vector<8x128xf32>
      %37 = arith.maximumf %6, %36 : vector<8x128xf32>
      %38 = arith.subf %35, %37 : vector<8x128xf32>
      %cst_13 = arith.constant 0.000000e+00 : f32
      %39 = vector.broadcast %cst_13 : f32 to vector<8x128xf32>
      %40 = arith.maximumf %38, %39 : vector<8x128xf32>
      %cst_14 = arith.constant 0.000000e+00 : f32
      %41 = vector.broadcast %cst_14 : f32 to vector<8x128xf32>
      %42 = arith.cmpf ogt, %40, %41 : vector<8x128xf32>
      %43 = arith.ori %42, %13 : vector<8x128xi1>
      %44 = vector.broadcast %c-2147483648_i32 : i32 to vector<8x128xi32>
      %45 = arith.select %43, %44, %arg7 : vector<8x128xi1>, vector<8x128xi32>
      %c1_i32_15 = arith.constant 1 : i32
      %46 = arith.addi %4, %c1_i32_15 : i32
      %c0_16 = arith.constant 0 : index
      %c0_17 = arith.constant 0 : index
      %47 = vector.load %arg2[%c0_16, %c0_17] : memref<8x128xf32, #tpu.memory_space<vmem>>, vector<8x128xf32>
      %c0_18 = arith.constant 0 : index
      %c0_19 = arith.constant 0 : index
      %48 = vector.load %arg3[%c0_18, %c0_19] : memref<8x128xf32, #tpu.memory_space<vmem>>, vector<8x128xf32>
      %cst_20 = arith.constant dense<-2147483648> : vector<8xi32>
      %49 = vector.multi_reduction <maxsi>, %45, %cst_20 [1] : vector<8x128xi32> to vector<8xi32>
      %50 = vector.shape_cast %49 : vector<8xi32> to vector<8x1xi32>
      %51 = vector.broadcast %c-2147483648_i32 : i32 to vector<8x1xi32>
      %52 = arith.cmpi sgt, %50, %51 : vector<8x1xi32>
      %53 = vector.broadcast %50 : vector<8x1xi32> to vector<8x128xi32>
      %54 = arith.cmpi eq, %45, %53 : vector<8x128xi32>
      %c127_i32_21 = arith.constant 127 : i32
      %55 = vector.broadcast %c127_i32_21 : i32 to vector<8x1xi32>
      %56 = arith.andi %50, %55 : vector<8x1xi32>
      %c127_i32_22 = arith.constant 127 : i32
      %57 = vector.broadcast %c127_i32_22 : i32 to vector<8x1xi32>
      %58 = arith.subi %57, %56 : vector<8x1xi32>
      %cst_23 = arith.constant 0xFF800000 : f32
      %59 = vector.broadcast %cst_23 : f32 to vector<8x128xf32>
      %60 = arith.select %54, %47, %59 : vector<8x128xi1>, vector<8x128xf32>
      %cst_24 = arith.constant dense<0xFF800000> : vector<8xf32>
      %61 = vector.multi_reduction <maximumf>, %60, %cst_24 [1] : vector<8x128xf32> to vector<8xf32>
      %62 = vector.shape_cast %61 : vector<8xf32> to vector<8x1xf32>
      %cst_25 = arith.constant 0x7F800000 : f32
      %63 = vector.broadcast %cst_25 : f32 to vector<8x128xf32>
      %64 = arith.select %54, %48, %63 : vector<8x128xi1>, vector<8x128xf32>
      %cst_26 = arith.constant dense<0x7F800000> : vector<8xf32>
      %65 = vector.multi_reduction <minimumf>, %64, %cst_26 [1] : vector<8x128xf32> to vector<8xf32>
      %66 = vector.shape_cast %65 : vector<8xf32> to vector<8x1xf32>
      %67 = tpu.iota {dimensions = array<i32: 1>} : vector<8x128xi32>
      %68 = vector.broadcast %46 : i32 to vector<8x128xi32>
      %69 = arith.cmpi eq, %67, %68 : vector<8x128xi32>
      %70 = vector.broadcast %52 : vector<8x1xi1> to vector<8x128xi1>
      %71 = arith.andi %70, %69 : vector<8x128xi1>
      %72 = vector.shape_cast %58 : vector<8x1xi32> to vector<8x1xi32>
      %73 = vector.broadcast %72 : vector<8x1xi32> to vector<8x128xi32>
      %74 = arith.select %71, %73, %33 : vector<8x128xi1>, vector<8x128xi32>
      %75 = vector.broadcast %66 : vector<8x1xf32> to vector<8x128xf32>
      %76 = arith.minimumf %48, %75 : vector<8x128xf32>
      %77 = vector.broadcast %62 : vector<8x1xf32> to vector<8x128xf32>
      %78 = arith.maximumf %47, %77 : vector<8x128xf32>
      %79 = arith.subf %76, %78 : vector<8x128xf32>
      %cst_27 = arith.constant 0.000000e+00 : f32
      %80 = vector.broadcast %cst_27 : f32 to vector<8x128xf32>
      %81 = arith.maximumf %79, %80 : vector<8x128xf32>
      %cst_28 = arith.constant 0.000000e+00 : f32
      %82 = vector.broadcast %cst_28 : f32 to vector<8x128xf32>
      %83 = arith.cmpf ogt, %81, %82 : vector<8x128xf32>
      %84 = arith.ori %83, %54 : vector<8x128xi1>
      %85 = vector.broadcast %c-2147483648_i32 : i32 to vector<8x128xi32>
      %86 = arith.select %84, %85, %45 : vector<8x128xi1>, vector<8x128xi32>
      %c2_i32 = arith.constant 2 : i32
      %87 = arith.addi %4, %c2_i32 : i32
      %c0_29 = arith.constant 0 : index
      %c0_30 = arith.constant 0 : index
      %88 = vector.load %arg2[%c0_29, %c0_30] : memref<8x128xf32, #tpu.memory_space<vmem>>, vector<8x128xf32>
      %c0_31 = arith.constant 0 : index
      %c0_32 = arith.constant 0 : index
      %89 = vector.load %arg3[%c0_31, %c0_32] : memref<8x128xf32, #tpu.memory_space<vmem>>, vector<8x128xf32>
      %cst_33 = arith.constant dense<-2147483648> : vector<8xi32>
      %90 = vector.multi_reduction <maxsi>, %86, %cst_33 [1] : vector<8x128xi32> to vector<8xi32>
      %91 = vector.shape_cast %90 : vector<8xi32> to vector<8x1xi32>
      %92 = vector.broadcast %c-2147483648_i32 : i32 to vector<8x1xi32>
      %93 = arith.cmpi sgt, %91, %92 : vector<8x1xi32>
      %94 = vector.broadcast %91 : vector<8x1xi32> to vector<8x128xi32>
      %95 = arith.cmpi eq, %86, %94 : vector<8x128xi32>
      %c127_i32_34 = arith.constant 127 : i32
      %96 = vector.broadcast %c127_i32_34 : i32 to vector<8x1xi32>
      %97 = arith.andi %91, %96 : vector<8x1xi32>
      %c127_i32_35 = arith.constant 127 : i32
      %98 = vector.broadcast %c127_i32_35 : i32 to vector<8x1xi32>
      %99 = arith.subi %98, %97 : vector<8x1xi32>
      %cst_36 = arith.constant 0xFF800000 : f32
      %100 = vector.broadcast %cst_36 : f32 to vector<8x128xf32>
      %101 = arith.select %95, %88, %100 : vector<8x128xi1>, vector<8x128xf32>
      %cst_37 = arith.constant dense<0xFF800000> : vector<8xf32>
      %102 = vector.multi_reduction <maximumf>, %101, %cst_37 [1] : vector<8x128xf32> to vector<8xf32>
      %103 = vector.shape_cast %102 : vector<8xf32> to vector<8x1xf32>
      %cst_38 = arith.constant 0x7F800000 : f32
      %104 = vector.broadcast %cst_38 : f32 to vector<8x128xf32>
      %105 = arith.select %95, %89, %104 : vector<8x128xi1>, vector<8x128xf32>
      %cst_39 = arith.constant dense<0x7F800000> : vector<8xf32>
      %106 = vector.multi_reduction <minimumf>, %105, %cst_39 [1] : vector<8x128xf32> to vector<8xf32>
      %107 = vector.shape_cast %106 : vector<8xf32> to vector<8x1xf32>
      %108 = tpu.iota {dimensions = array<i32: 1>} : vector<8x128xi32>
      %109 = vector.broadcast %87 : i32 to vector<8x128xi32>
      %110 = arith.cmpi eq, %108, %109 : vector<8x128xi32>
      %111 = vector.broadcast %93 : vector<8x1xi1> to vector<8x128xi1>
      %112 = arith.andi %111, %110 : vector<8x128xi1>
      %113 = vector.shape_cast %99 : vector<8x1xi32> to vector<8x1xi32>
      %114 = vector.broadcast %113 : vector<8x1xi32> to vector<8x128xi32>
      %115 = arith.select %112, %114, %74 : vector<8x128xi1>, vector<8x128xi32>
      %116 = vector.broadcast %107 : vector<8x1xf32> to vector<8x128xf32>
      %117 = arith.minimumf %89, %116 : vector<8x128xf32>
      %118 = vector.broadcast %103 : vector<8x1xf32> to vector<8x128xf32>
      %119 = arith.maximumf %88, %118 : vector<8x128xf32>
      %120 = arith.subf %117, %119 : vector<8x128xf32>
      %cst_40 = arith.constant 0.000000e+00 : f32
      %121 = vector.broadcast %cst_40 : f32 to vector<8x128xf32>
      %122 = arith.maximumf %120, %121 : vector<8x128xf32>
      %cst_41 = arith.constant 0.000000e+00 : f32
      %123 = vector.broadcast %cst_41 : f32 to vector<8x128xf32>
      %124 = arith.cmpf ogt, %122, %123 : vector<8x128xf32>
      %125 = arith.ori %124, %95 : vector<8x128xi1>
      %126 = vector.broadcast %c-2147483648_i32 : i32 to vector<8x128xi32>
      %127 = arith.select %125, %126, %86 : vector<8x128xi1>, vector<8x128xi32>
      %c3_i32 = arith.constant 3 : i32
      %128 = arith.addi %4, %c3_i32 : i32
      %c0_42 = arith.constant 0 : index
      %c0_43 = arith.constant 0 : index
      %129 = vector.load %arg2[%c0_42, %c0_43] : memref<8x128xf32, #tpu.memory_space<vmem>>, vector<8x128xf32>
      %c0_44 = arith.constant 0 : index
      %c0_45 = arith.constant 0 : index
      %130 = vector.load %arg3[%c0_44, %c0_45] : memref<8x128xf32, #tpu.memory_space<vmem>>, vector<8x128xf32>
      %cst_46 = arith.constant dense<-2147483648> : vector<8xi32>
      %131 = vector.multi_reduction <maxsi>, %127, %cst_46 [1] : vector<8x128xi32> to vector<8xi32>
      %132 = vector.shape_cast %131 : vector<8xi32> to vector<8x1xi32>
      %133 = vector.broadcast %c-2147483648_i32 : i32 to vector<8x1xi32>
      %134 = arith.cmpi sgt, %132, %133 : vector<8x1xi32>
      %135 = vector.broadcast %132 : vector<8x1xi32> to vector<8x128xi32>
      %136 = arith.cmpi eq, %127, %135 : vector<8x128xi32>
      %c127_i32_47 = arith.constant 127 : i32
      %137 = vector.broadcast %c127_i32_47 : i32 to vector<8x1xi32>
      %138 = arith.andi %132, %137 : vector<8x1xi32>
      %c127_i32_48 = arith.constant 127 : i32
      %139 = vector.broadcast %c127_i32_48 : i32 to vector<8x1xi32>
      %140 = arith.subi %139, %138 : vector<8x1xi32>
      %cst_49 = arith.constant 0xFF800000 : f32
      %141 = vector.broadcast %cst_49 : f32 to vector<8x128xf32>
      %142 = arith.select %136, %129, %141 : vector<8x128xi1>, vector<8x128xf32>
      %cst_50 = arith.constant dense<0xFF800000> : vector<8xf32>
      %143 = vector.multi_reduction <maximumf>, %142, %cst_50 [1] : vector<8x128xf32> to vector<8xf32>
      %144 = vector.shape_cast %143 : vector<8xf32> to vector<8x1xf32>
      %cst_51 = arith.constant 0x7F800000 : f32
      %145 = vector.broadcast %cst_51 : f32 to vector<8x128xf32>
      %146 = arith.select %136, %130, %145 : vector<8x128xi1>, vector<8x128xf32>
      %cst_52 = arith.constant dense<0x7F800000> : vector<8xf32>
      %147 = vector.multi_reduction <minimumf>, %146, %cst_52 [1] : vector<8x128xf32> to vector<8xf32>
      %148 = vector.shape_cast %147 : vector<8xf32> to vector<8x1xf32>
      %149 = tpu.iota {dimensions = array<i32: 1>} : vector<8x128xi32>
      %150 = vector.broadcast %128 : i32 to vector<8x128xi32>
      %151 = arith.cmpi eq, %149, %150 : vector<8x128xi32>
      %152 = vector.broadcast %134 : vector<8x1xi1> to vector<8x128xi1>
      %153 = arith.andi %152, %151 : vector<8x128xi1>
      %154 = vector.shape_cast %140 : vector<8x1xi32> to vector<8x1xi32>
      %155 = vector.broadcast %154 : vector<8x1xi32> to vector<8x128xi32>
      %156 = arith.select %153, %155, %115 : vector<8x128xi1>, vector<8x128xi32>
      %157 = vector.broadcast %148 : vector<8x1xf32> to vector<8x128xf32>
      %158 = arith.minimumf %130, %157 : vector<8x128xf32>
      %159 = vector.broadcast %144 : vector<8x1xf32> to vector<8x128xf32>
      %160 = arith.maximumf %129, %159 : vector<8x128xf32>
      %161 = arith.subf %158, %160 : vector<8x128xf32>
      %cst_53 = arith.constant 0.000000e+00 : f32
      %162 = vector.broadcast %cst_53 : f32 to vector<8x128xf32>
      %163 = arith.maximumf %161, %162 : vector<8x128xf32>
      %cst_54 = arith.constant 0.000000e+00 : f32
      %164 = vector.broadcast %cst_54 : f32 to vector<8x128xf32>
      %165 = arith.cmpf ogt, %163, %164 : vector<8x128xf32>
      %166 = arith.ori %165, %136 : vector<8x128xi1>
      %167 = vector.broadcast %c-2147483648_i32 : i32 to vector<8x128xi32>
      %168 = arith.select %166, %167, %127 : vector<8x128xi1>, vector<8x128xi32>
      %169 = vector.shape_cast %132 : vector<8x1xi32> to vector<1x8x1xi32>
      %cst_55 = arith.constant dense<-2147483648> : vector<1xi32>
      %170 = vector.multi_reduction <maxsi>, %169, %cst_55 [1, 2] : vector<1x8x1xi32> to vector<1xi32>
      %171 = vector.shape_cast %170 : vector<1xi32> to vector<1x1x1xi32>
      %172 = vector.extract %171[0, 0, 0] : i32 from vector<1x1x1xi32>
      %173 = arith.cmpi sgt, %172, %c-2147483648_i32 : i32
      %174 = arith.extui %173 : i1 to i32
      %c1_i32_56 = arith.constant 1 : i32
      %175 = arith.addi %arg5, %c1_i32_56 : i32
      scf.yield %175, %174, %168, %156 : i32, i32, vector<8x128xi32>, vector<8x128xi32>
    }
    %c0_1 = arith.constant 0 : index
    %c0_2 = arith.constant 0 : index
    %3 = vector.load %arg4[%c0_1, %c0_2] : memref<8x128xi32, #tpu.memory_space<vmem>>, vector<8x128xi32>
    tpu.vector_store %arg4[%c0_1, %c0_2], %2#3 {strides = array<i32>} : memref<8x128xi32, #tpu.memory_space<vmem>>, vector<8x128xi32>,
    return
  }
  func.func @transform_0(%arg0: i32) -> (i32, i32) {
    %c0_i32 = arith.constant 0 : i32
    %c0_i32_0 = arith.constant 0 : i32
    return %arg0, %c0_i32 : i32, i32
  }
  func.func @transform_1(%arg0: i32) -> (i32, i32) {
    %c0_i32 = arith.constant 0 : i32
    %c0_i32_0 = arith.constant 0 : i32
    return %arg0, %c0_i32 : i32, i32
  }
  func.func @transform_2(%arg0: i32) -> (i32, i32) {
    %c0_i32 = arith.constant 0 : i32
    %c0_i32_0 = arith.constant 0 : i32
    return %arg0, %c0_i32 : i32, i32
  }
  func.func @transform_3(%arg0: i32) -> (i32, i32) {
    %c0_i32 = arith.constant 0 : i32
    %c0_i32_0 = arith.constant 0 : i32
    return %arg0, %c0_i32 : i32, i32
  }
}

</mosaic_0001>

<llo_original>
// kernel: _nms_pallas.1
$region0: #{_nms_pallas.1}
  #allocation0 [shape = 'u32[]', space=smem, size = 0x4, offset = 0x4, fixed_abs, tag = 'smem constant byte address 0x4 - core index']
  #allocation1 [shape = 'u32[72,128]{1,0:T(1,128)}', space=vmem, size = 0x9000, scoped, tag = 'internal scratch']
  %s0 = inlined_call_operand.vmem [shape: s32[8,128], index: 0, kind: input, shape index: {}]
  %s1 = inlined_call_operand.vmem [shape: f32[8,128], index: 1, kind: input, shape index: {}]
  %s2 = inlined_call_operand.vmem [shape: f32[8,128], index: 2, kind: input, shape index: {}]
  %s3 = inlined_call_operand.vmem [shape: s32[8,128], index: 3, kind: output, shape index: {}]
  %s4 = sld [smem:[#allocation0]]
  $region29: #{_nms_pallas.1} parent=0
    _
  %s6 = ssub.s32 1, %s4
  %s7 = scalar_select 0, %s6, %s4
  // Predicated region
  $region2: #{_nms_pallas.1} parent=0 // pred_check
    _
  $region3: #{_nms_pallas.1} parent=0 // pred_check_branch
    %9 = sbr.rel (0) target = $region5
  $region4: #{_nms_pallas.1} parent=0 // pred_region
    _
  $region5: #{_nms_pallas.1} parent=0 // pred_fallthru
    _
  // Predicated region
  $region6: #{_nms_pallas.1} parent=0 // pred_check
    _
  $region7: #{_nms_pallas.1} parent=0 // pred_check_branch
    %11 = sbr.rel (0) target = $region9
  $region8: #{_nms_pallas.1} parent=0 // pred_region
    _
  $region9: #{_nms_pallas.1} parent=0 // pred_fallthru
    _
  // Predicated region
  $region10: #{_nms_pallas.1} parent=0 // pred_check
    _
  $region11: #{_nms_pallas.1} parent=0 // pred_check_branch
    %13 = sbr.rel (0) target = $region13
  $region12: #{_nms_pallas.1} parent=0 // pred_region
    _
  $region13: #{_nms_pallas.1} parent=0 // pred_fallthru
    _
  %v14 = vld [vmem:[%s0] sm:$0xff]
  // While loop
  $region14: #{_nms_pallas.1} parent=0 // loop_pre_header
    _
  $region15: #{_nms_pallas.1} parent=0 // loop_header
    %s16 = sphi 0, %s194
    %s17 = sphi 1, %s193
    %v18 = vphi %v14, %v181
    %v19 = vphi 4294967295, %v174
    %p20 = scmp.gt.s32.totalorder %s17, 0
    %p21 = scmp.lt.s32.totalorder %s16, 4
    %p22 = pnand %p20, %p21
    %p23 = pneg %p22
  $region16: #{_nms_pallas.1} parent=0 // loop_header_branch
    %25 = sbr.rel (%p22) target = $region20
  $region17: #{_nms_pallas.1} parent=0 // loop_body
    %s26 = smul.u32 %s16, 4
    %v27 = vld [vmem:[%s1] sm:$0xff]
    %v28 = vld [vmem:[%s2] sm:$0xff]
    %v29 = vand.u32 %v18, 65535
    %v30 = vshra.s32 %v18, 16
    %v31 = vcvt.s32.f32 %v29
    %v32 = vcvt.s32.f32 %v30
    %33 = vmax.xlane.f32.xlu0 %v32
    %v34 = vpop.xlane.xlu0 %33
    %vm35 = vcmp.eq.f32.partialorder %v32, %v34
    %v36 = vsel %vm35, %v31, -inf
    %37 = vmax.xlane.f32.xlu0 %v36
    %v38 = vpop.xlane.xlu0 %37
    %v39 = vcvt.f32.s32 %v38
    %v40 = vcvt.f32.s32 %v34
    %v41 = vshll.u32 %v40, 16
    %v42 = vadd.s32 %v41, %v39
    %vm43 = vcmp.gt.s32.totalorder %v42, 2147483648
    %vm44 = vcmp.eq.s32.totalorder %v18, %v42
    %v45 = vand.u32 %v42, 127
    %v46 = vsub.s32 127, %v45
    %v47 = vsel %vm44, %v27, -inf
    %48 = vmax.xlane.f32.xlu0 %v47
    %v49 = vpop.xlane.xlu0 %48
    %v50 = vsel %vm44, %v28, inf
    %51 = vmin.xlane.f32.xlu0 %v50
    %v52 = vpop.xlane.xlu0 %51
    %v53 = vlaneseq
    %v54 = vand.u32 %v53, 127
    %v55 = vstv %s26
    %vm56 = vcmp.eq.s32.totalorder %v54, %v55
    %v57 = vsel %vm43, 1, 0
    %vm58 = vcmp.eq.s32.totalorder %v57, 1
    %vm59 = vmand %vm58, %vm56
    %v60 = vsel %vm59, %v46, %v19
    %v61 = vmin.f32 %v28, %v52
    %v62 = vmax.f32 %v27, %v49
    %v63 = vsub.f32 %v61, %v62
    %v64 = vmax.f32 %v63, 0.0
    %vm65 = vcmp.gt.f32.partialorder %v64, 0.0
    %vm66 = vmor %vm65, %vm44
    %v67 = vsel %vm66, 2147483648, %v18
    %s68 = sadd.s32 %s26, 1
    %v69 = vand.u32 %v67, 65535
    %v70 = vshra.s32 %v67, 16
    %v71 = vcvt.s32.f32 %v69
    %v72 = vcvt.s32.f32 %v70
    %73 = vmax.xlane.f32.xlu0 %v72
    %v74 = vpop.xlane.xlu0 %73
    %vm75 = vcmp.eq.f32.partialorder %v72, %v74
    %v76 = vsel %vm75, %v71, -inf
    %77 = vmax.xlane.f32.xlu0 %v76
    %v78 = vpop.xlane.xlu0 %77
    %v79 = vcvt.f32.s32 %v78
    %v80 = vcvt.f32.s32 %v74
    %v81 = vshll.u32 %v80, 16
    %v82 = vadd.s32 %v81, %v79
    %vm83 = vcmp.gt.s32.totalorder %v82, 2147483648
    %vm84 = vcmp.eq.s32.totalorder %v67, %v82
    %v85 = vand.u32 %v82, 127
    %v86 = vsub.s32 127, %v85
    %v87 = vsel %vm84, %v27, -inf
    %88 = vmax.xlane.f32.xlu0 %v87
    %v89 = vpop.xlane.xlu0 %88
    %v90 = vsel %vm84, %v28, inf
    %91 = vmin.xlane.f32.xlu0 %v90
    %v92 = vpop.xlane.xlu0 %91
    %v93 = vstv %s68
    %vm94 = vcmp.eq.s32.totalorder %v54, %v93
    %v95 = vsel %vm83, 1, 0
    %vm96 = vcmp.eq.s32.totalorder %v95, 1
    %vm97 = vmand %vm96, %vm94
    %v98 = vsel %vm97, %v86, %v60
    %v99 = vmin.f32 %v28, %v92
    %v100 = vmax.f32 %v27, %v89
    %v101 = vsub.f32 %v99, %v100
    %v102 = vmax.f32 %v101, 0.0
    %vm103 = vcmp.gt.f32.partialorder %v102, 0.0
    %vm104 = vmor %vm103, %vm84
    %v105 = vsel %vm104, 2147483648, %v67
    %s106 = sadd.s32 %s26, 2
    %v107 = vand.u32 %v105, 65535
    %v108 = vshra.s32 %v105, 16
    %v109 = vcvt.s32.f32 %v107
    %v110 = vcvt.s32.f32 %v108
    %111 = vmax.xlane.f32.xlu0 %v110
    %v112 = vpop.xlane.xlu0 %111
    %vm113 = vcmp.eq.f32.partialorder %v110, %v112
    %v114 = vsel %vm113, %v109, -inf
    %115 = vmax.xlane.f32.xlu0 %v114
    %v116 = vpop.xlane.xlu0 %115
    %v117 = vcvt.f32.s32 %v116
    %v118 = vcvt.f32.s32 %v112
    %v119 = vshll.u32 %v118, 16
    %v120 = vadd.s32 %v119, %v117
    %vm121 = vcmp.gt.s32.totalorder %v120, 2147483648
    %vm122 = vcmp.eq.s32.totalorder %v105, %v120
    %v123 = vand.u32 %v120, 127
    %v124 = vsub.s32 127, %v123
    %v125 = vsel %vm122, %v27, -inf
    %126 = vmax.xlane.f32.xlu0 %v125
    %v127 = vpop.xlane.xlu0 %126
    %v128 = vsel %vm122, %v28, inf
    %129 = vmin.xlane.f32.xlu0 %v128
    %v130 = vpop.xlane.xlu0 %129
    %v131 = vstv %s106
    %vm132 = vcmp.eq.s32.totalorder %v54, %v131
    %v133 = vsel %vm121, 1, 0
    %vm134 = vcmp.eq.s32.totalorder %v133, 1
    %vm135 = vmand %vm134, %vm132
    %v136 = vsel %vm135, %v124, %v98
    %v137 = vmin.f32 %v28, %v130
    %v138 = vmax.f32 %v27, %v127
    %v139 = vsub.f32 %v137, %v138
    %v140 = vmax.f32 %v139, 0.0
    %vm141 = vcmp.gt.f32.partialorder %v140, 0.0
    %vm142 = vmor %vm141, %vm122
    %v143 = vsel %vm142, 2147483648, %v105
    %s144 = sadd.s32 %s26, 3
    %v145 = vand.u32 %v143, 65535
    %v146 = vshra.s32 %v143, 16
    %v147 = vcvt.s32.f32 %v145
    %v148 = vcvt.s32.f32 %v146
    %149 = vmax.xlane.f32.xlu0 %v148
    %v150 = vpop.xlane.xlu0 %149
    %vm151 = vcmp.eq.f32.partialorder %v148, %v150
    %v152 = vsel %vm151, %v147, -inf
    %153 = vmax.xlane.f32.xlu0 %v152
    %v154 = vpop.xlane.xlu0 %153
    %v155 = vcvt.f32.s32 %v154
    %v156 = vcvt.f32.s32 %v150
    %v157 = vshll.u32 %v156, 16
    %v158 = vadd.s32 %v157, %v155
    %vm159 = vcmp.gt.s32.totalorder %v158, 2147483648
    %vm160 = vcmp.eq.s32.totalorder %v143, %v158
    %v161 = vand.u32 %v158, 127
    %v162 = vsub.s32 127, %v161
    %v163 = vsel %vm160, %v27, -inf
    %164 = vmax.xlane.f32.xlu0 %v163
    %v165 = vpop.xlane.xlu0 %164
    %v166 = vsel %vm160, %v28, inf
    %167 = vmin.xlane.f32.xlu0 %v166
    %v168 = vpop.xlane.xlu0 %167
    %v169 = vstv %s144
    %vm170 = vcmp.eq.s32.totalorder %v54, %v169
    %v171 = vsel %vm159, 1, 0
    %vm172 = vcmp.eq.s32.totalorder %v171, 1
    %vm173 = vmand %vm172, %vm170
    %v174 = vsel %vm173, %v162, %v136
    %v175 = vmin.f32 %v28, %v168
    %v176 = vmax.f32 %v27, %v165
    %v177 = vsub.f32 %v175, %v176
    %v178 = vmax.f32 %v177, 0.0
    %vm179 = vcmp.gt.f32.partialorder %v178, 0.0
    %vm180 = vmor %vm179, %vm160
    %v181 = vsel %vm180, 2147483648, %v143
    %v182 = vrot.slane %v158, 4
    %vm183 = vcmp.gt.s32.totalorder %v158, %v182
    %v184 = vsel %vm183, %v158, %v182
    %v185 = vrot.slane %v184, 2
    %vm186 = vcmp.gt.s32.totalorder %v184, %v185
    %v187 = vsel %vm186, %v184, %v185
    %v188 = vrot.slane %v187, 1
    %vm189 = vcmp.gt.s32.totalorder %v187, %v188
    %v190 = vsel %vm189, %v187, %v188
    %s191 = vtos %v190
    %p192 = scmp.gt.s32.totalorder %s191, 2147483648
    %s193 = scalar_select %p192, 1, 0
    %s194 = sadd.s32 %s16, 1
  $region18: #{_nms_pallas.1} parent=0 // loop_footer
    _
  $region19: #{_nms_pallas.1} parent=0 // loop_footer_branch
    %15 = sbr.rel target = $region15
  $region20: #{_nms_pallas.1} parent=0 // loop_exit
    _
  %195 = vst [vmem:[%s3] sm:$0xff] %v19
  // Predicated region
  $region21: #{_nms_pallas.1} parent=0 // pred_check
    _
  $region22: #{_nms_pallas.1} parent=0 // pred_check_branch
    %197 = sbr.rel (0) target = $region24
  $region23: #{_nms_pallas.1} parent=0 // pred_region
    _
  $region24: #{_nms_pallas.1} parent=0 // pred_fallthru
    _
  // Predicated region
  $region25: #{_nms_pallas.1} parent=0 // pred_check
    _
  $region26: #{_nms_pallas.1} parent=0 // pred_check_branch
    %199 = sbr.rel (0) target = $region28
  $region27: #{_nms_pallas.1} parent=0 // pred_region
    _
  $region28: #{_nms_pallas.1} parent=0 // pred_fallthru
    _

</llo_original>
